<compile_context>
chip_gen: v7x
topology: tpu7x:2x2x1
jax: 0.10.0
libtpu: 0.0.40
codegen_flags: <defaults>
</compile_context>

<pallas_src>
import jax
import jax.numpy as jnp
from jax.experimental import pallas as pl
from jax.experimental.pallas import tpu as pltpu

# Tile-size caps (clamped to the actual padded array dims below).
_TR_MAX = 256    # rows per tile  (multiple of 8)
_TP_MAX = 1024   # lanes per tile (multiple of 128)


def _round_up(a, b):
    return ((a + b - 1) // b) * b


def _prelu_kernel(x_ref, w_ref, o_ref):
    # x_ref: (TR, TP) tile of the flattened input
    # w_ref: (TR, 1) per-row (per-channel) slope, broadcast across lanes
    y = x_ref[...] + x_ref[...]              # inputs + inputs
    o_ref[...] = jnp.where(y > 0, y, w_ref[...] * y)


def simple_prelu(inputs, weights):
    """inputs: (N, C, H, W); weights: (C,) or (1,) -- same dtype as inputs."""
    n, c, h, w = inputs.shape
    rows = n * c
    pix = h * w
    dtype = inputs.dtype

    # Per-row slope: broadcast channel weights across the batch dim.
    w_ch = jnp.broadcast_to(jnp.asarray(weights, dtype).reshape(-1), (c,))
    w_rows = jnp.broadcast_to(w_ch[None, :], (n, c)).reshape(rows, 1)

    x2d = inputs.reshape(rows, pix)

    # Tile sizes: TR multiple of 8, TP multiple of 128, clamped to array size.
    tr = min(_TR_MAX, _round_up(rows, 8))
    tp = min(_TP_MAX, _round_up(pix, 128))

    # Pad the slab up to whole tiles so every block is full and lane-dense.
    rows_p = _round_up(rows, tr)
    pix_p = _round_up(pix, tp)
    if (rows_p, pix_p) != (rows, pix):
        x2d = jnp.pad(x2d, ((0, rows_p - rows), (0, pix_p - pix)))
        w_rows = jnp.pad(w_rows, ((0, rows_p - rows), (0, 0)))

    grid = (rows_p // tr, pix_p // tp)

    out2d = pl.pallas_call(
        _prelu_kernel,
        out_shape=jax.ShapeDtypeStruct((rows_p, pix_p), dtype),
        grid=grid,
        in_specs=[
            pl.BlockSpec((tr, tp), lambda i, j: (i, j)),
            pl.BlockSpec((tr, 1), lambda i, j: (i, 0)),
        ],
        out_specs=pl.BlockSpec((tr, tp), lambda i, j: (i, j)),
        compiler_params=pltpu.CompilerParams(
            # Elementwise: every (i, j) writes a distinct output tile, so both
            # axes are parallel -> megacore sharding on v7x, no-op on v5e/v6e.
            dimension_semantics=("parallel", "parallel"),
        ),
    )(x2d, w_rows)

    out2d = out2d[:rows, :pix]
    return out2d.reshape(n, c, h, w)


if __name__ == "__main__":
    key = jax.random.PRNGKey(0)
    kx, kw = jax.random.split(key)

    N, C, H, W = 2, 4, 16, 16
    x = jax.random.normal(kx, (N, C, H, W), dtype=jnp.float32)
    # The module has no params of its own; the test passes `weights` explicitly.
    weights = jax.random.uniform(kw, (C,), dtype=jnp.float32)

    out = simple_prelu(x, weights)
    out = jax.block_until_ready(out)

    # Reference check in plain JAX.
    y = x + x
    ref = jnp.where(y > 0, y, weights[None, :, None, None] * y)
    assert out.shape == (N, C, H, W)
    assert jnp.allclose(out, ref, atol=1e-6), "mismatch vs reference"

    print("KERNEL_OK")
</pallas_src>

<mosaic_0001>
module attributes {stable_mosaic.version = 11 : i64} {
  func.func @_prelu_kernel(%arg0: i32, %arg1: i32, %arg2: memref<8x256xf32, #tpu.memory_space<vmem>>, %arg3: memref<8x1xf32, #tpu.memory_space<vmem>>, %arg4: memref<8x256xf32, #tpu.memory_space<vmem>>) attributes {dimension_semantics = [#tpu.dimension_semantics<parallel>, #tpu.dimension_semantics<parallel>], iteration_bounds = array<i64: 1, 1>, scalar_prefetch = 0 : i64, scratch_operands = 0 : i64, tpu.core_type = #tpu.core_type<tc>, window_params = [{transform_indices = @transform_0, window_bounds = array<i64: 8, 256>}, {transform_indices = @transform_1, window_bounds = array<i64: 8, 1>}, {transform_indices = @transform_2, window_bounds = array<i64: 8, 256>}]} {
    %c0 = arith.constant 0 : index
    %c0_0 = arith.constant 0 : index
    %0 = vector.load %arg2[%c0, %c0_0] : memref<8x256xf32, #tpu.memory_space<vmem>>, vector<8x256xf32>
    %c0_1 = arith.constant 0 : index
    %c0_2 = arith.constant 0 : index
    %1 = vector.load %arg2[%c0_1, %c0_2] : memref<8x256xf32, #tpu.memory_space<vmem>>, vector<8x256xf32>
    %2 = arith.addf %0, %1 : vector<8x256xf32>
    %cst = arith.constant 0.000000e+00 : f32
    %3 = vector.broadcast %cst : f32 to vector<8x256xf32>
    %4 = arith.cmpf ogt, %2, %3 : vector<8x256xf32>
    %c0_3 = arith.constant 0 : index
    %c0_4 = arith.constant 0 : index
    %5 = vector.load %arg3[%c0_3, %c0_4] : memref<8x1xf32, #tpu.memory_space<vmem>>, vector<8x1xf32>
    %6 = vector.broadcast %5 : vector<8x1xf32> to vector<8x256xf32>
    %7 = arith.mulf %6, %2 : vector<8x256xf32>
    %8 = arith.select %4, %2, %7 : vector<8x256xi1>, vector<8x256xf32>
    %c0_5 = arith.constant 0 : index
    %c0_6 = arith.constant 0 : index
    %9 = vector.load %arg4[%c0_5, %c0_6] : memref<8x256xf32, #tpu.memory_space<vmem>>, vector<8x256xf32>
    tpu.vector_store %arg4[%c0_5, %c0_6], %8 {strides = array<i32>} : memref<8x256xf32, #tpu.memory_space<vmem>>, vector<8x256xf32>,
    return
  }
  func.func @transform_0(%arg0: i32, %arg1: i32) -> (i32, i32) {
    %c0_i32 = arith.constant 0 : i32
    return %arg0, %arg1 : i32, i32
  }
  func.func @transform_1(%arg0: i32, %arg1: i32) -> (i32, i32) {
    %c0_i32 = arith.constant 0 : i32
    %c0_i32_0 = arith.constant 0 : i32
    return %arg0, %c0_i32 : i32, i32
  }
  func.func @transform_2(%arg0: i32, %arg1: i32) -> (i32, i32) {
    %c0_i32 = arith.constant 0 : i32
    return %arg0, %arg1 : i32, i32
  }
}

</mosaic_0001>

<llo_original>
// kernel: tpu_custom_call.1
$region0: #{tpu_custom_call.1}
  #allocation0 [shape = 'u32[]', space=smem, size = 0x4, offset = 0x4, fixed_abs, tag = 'smem constant byte address 0x4 - core index']
  #allocation1 [shape = 'u32[144,128]{1,0:T(1,128)}', space=vmem, size = 0x12000, scoped, tag = 'internal scratch']
  %s0 = inlined_call_operand.hbm [shape: f32[8,256], index: 0, kind: input, shape index: {}]
  %s1 = inlined_call_operand.vmem [shape: f32[8,1], index: 1, kind: input, shape index: {}]
  %s2 = inlined_call_operand.hbm [shape: f32[8,256], index: 2, kind: output, shape index: {}]
  %s3 = sld [smem:[#allocation0]]
  $region22: #{tpu_custom_call.1} parent=0
    _
  %s5 = ssub.s32 1, %s3
  %s6 = scalar_select 0, %s5, %s3
  $region1: #{tpu_custom_call.1} parent=0
    #allocation2 [shape = 'u8[8192]{0}', space=vmem, size = 0x2000, scoped, tag = 'input window, operand 0, single buffered']
    #allocation3 [shape = 's32[1]{0}', space=sflag, size = 0x4, scoped, tag = 'scoped memory for tpu_custom_call.1']
    #allocation4 [shape = 's32[1]{0}', space=sflag, size = 0x4, scoped, tag = 'scoped memory for tpu_custom_call.1']
    #allocation5 [shape = 'u8[8192]{0}', space=vmem, size = 0x2000, scoped, tag = 'output window, operand 0, single buffered']
    %7 = vsyncpa [#allocation3], 0
    %8 = vsyncpa [#allocation4], 0
    // Predicated region
    $region2: #{tpu_custom_call.1} parent=1 // pred_check
      _
    $region3: #{tpu_custom_call.1} parent=1 // pred_check_branch
      %10 = sbr.rel (0) target = $region5
    $region4: #{tpu_custom_call.1} parent=1 // pred_region
      %s12 = ssub.s32 256, 256
      %13 = vsyncadd [#allocation3], %s12
      %s15 = sshll.u32 [#allocation2], 4
      %s16 = int_to_ptr.vmem [resolvable:$true] %s15
      %18 = dma.hbm_to_vmem [thread:$0]  %s0, 256, %s16, [#allocation3]
    $region5: #{tpu_custom_call.1} parent=1 // pred_fallthru
      _
    // Predicated region
    $region6: #{tpu_custom_call.1} parent=1 // pred_check
      _
    $region7: #{tpu_custom_call.1} parent=1 // pred_check_branch
      %20 = sbr.rel (0) target = $region9
    $region8: #{tpu_custom_call.1} parent=1 // pred_region
      _
    $region9: #{tpu_custom_call.1} parent=1 // pred_fallthru
      _
    // Predicated region
    $region10: #{tpu_custom_call.1} parent=1 // pred_check
      _
    $region11: #{tpu_custom_call.1} parent=1 // pred_check_branch
      %22 = sbr.rel (0) target = $region13
    $region12: #{tpu_custom_call.1} parent=1 // pred_region
      %23 = dma.done [#allocation3], 256
    $region13: #{tpu_custom_call.1} parent=1 // pred_fallthru
      _
    %v24 = vld [vmem:[#allocation2] sm:$0xff]
    %v25 = vld [vmem:[#allocation2 + $0x8] sm:$0xff]
    %v26 = vadd.f32 %v24, %v24
    %v27 = vadd.f32 %v25, %v25
    %vm28 = vcmp.gt.f32.partialorder %v26, 0.0
    %vm29 = vcmp.gt.f32.partialorder %v27, 0.0
    %v30 = vld [vmem:[%s1] sm:$0xff]
    %32 = vset.pattern.permute.xlu0 0
    %33 = vperm.xlu0 %32, %v30
    %v34 = vpop.permute.xlu0 %33
    %v36 = vmul.f32 %v34, %v26
    %v37 = vmul.f32 %v34, %v27
    %v38 = vsel %vm28, %v26, %v36
    %v39 = vsel %vm29, %v27, %v37
    %40 = vst [vmem:[#allocation5] sm:$0xff] %v38
    %41 = vst [vmem:[#allocation5 + $0x8] sm:$0xff] %v39
    // Predicated region
    $region14: #{tpu_custom_call.1} parent=1 // pred_check
      _
    $region15: #{tpu_custom_call.1} parent=1 // pred_check_branch
      %43 = sbr.rel (0) target = $region17
    $region16: #{tpu_custom_call.1} parent=1 // pred_region
      %s45 = ssub.s32 256, 256
      %46 = vsyncadd [#allocation4], %s45
      %s48 = sshll.u32 [#allocation5], 4
      %s49 = int_to_ptr.vmem [resolvable:$true] %s48
      %51 = dma.vmem_to_hbm [thread:$0]  %s49, 256, %s2, [#allocation4]
    $region17: #{tpu_custom_call.1} parent=1 // pred_fallthru
      _
    // Predicated region
    $region18: #{tpu_custom_call.1} parent=1 // pred_check
      _
    $region19: #{tpu_custom_call.1} parent=1 // pred_check_branch
      %53 = sbr.rel (0) target = $region21
    $region20: #{tpu_custom_call.1} parent=1 // pred_region
      %54 = dma.done [#allocation4], 256
    $region21: #{tpu_custom_call.1} parent=1 // pred_fallthru
      _
    %55 = vsyncpa [#allocation3], 1
    %56 = vsyncpa [#allocation4], 1

</llo_original>
